<compile_context>
chip_gen: v5e
topology: v5e:2x2
jax: 0.10.0
libtpu: 0.0.40
codegen_flags: <defaults>
</compile_context>

<pallas_src>
import functools

import jax
import jax.numpy as jnp
from jax.experimental import pallas as pl
from jax.experimental.pallas import tpu as pltpu


def _outconv_kernel_vpu(x_ref, w_ref, b_ref, o_ref):
    # Tiny-channel path: keep everything on the VPU/XLU, no MXU push/pop.
    # x_ref: (1, Cin, TM)  w_ref: (Cout, Cin)  b_ref: (Cout, 1)  o_ref: (1, Cout, TM)
    x = x_ref[0].astype(jnp.float32)          # (Cin, TM)
    w = w_ref[...].astype(jnp.float32)        # (Cout, Cin)
    b = b_ref[...].astype(jnp.float32)        # (Cout, 1)
    # (Cout, Cin, 1) * (1, Cin, TM) summed over Cin -> (Cout, TM)
    acc = jnp.sum(w[:, :, None] * x[None, :, :], axis=1) + b
    o_ref[0] = acc.astype(o_ref.dtype)


def _outconv_kernel_mxu(x_ref, w_ref, b_ref, o_ref):
    # General path: W[Cout, Cin] @ x[Cin, TM] on the MXU, f32 accumulation.
    acc = jnp.dot(w_ref[...], x_ref[0], preferred_element_type=jnp.float32)
    o_ref[0] = (acc + b_ref[...].astype(jnp.float32)).astype(o_ref.dtype)


@functools.partial(jax.jit, static_argnames=("tm",))
def outconv_forward(x_nchw, weight, bias, *, tm=512):
    """1x1 Conv2d forward.

    x_nchw : (N, Cin, H, W)
    weight : (Cout, Cin, 1, 1)   -- same shape as nn.Conv2d(kernel_size=1).weight
    bias   : (Cout,)
    returns: (N, Cout, H, W)
    """
    N, Cin, H, W = x_nchw.shape
    Cout = weight.shape[0]
    HW = H * W

    # Free reshapes: NCHW is already (N, Cin, H*W) contiguous.
    x_mat = x_nchw.reshape(N, Cin, HW)
    w_mat = weight.reshape(Cout, Cin)
    b_mat = bias.reshape(Cout, 1)

    # Pixel tile: lane axis. If the image is smaller than the requested tile,
    # use the full extent (block == full dim, no (8,128) constraint issue);
    # otherwise keep tm a multiple of 128 and let Pallas mask the ragged tail.
    tm_eff = HW if HW <= tm else tm
    grid_p = pl.cdiv(HW, tm_eff)

    itemsize = x_mat.dtype.itemsize
    cost = pl.CostEstimate(
        flops=2 * N * HW * Cin * Cout,
        transcendentals=0,
        bytes_accessed=(N * Cin * HW + N * Cout * HW) * itemsize
        + (Cout * Cin + Cout) * itemsize,
    )

    # Tiny channel counts: skip the MXU entirely (it would be >99% idle).
    kernel = _outconv_kernel_vpu if (Cin <= 8 and Cout <= 8) else _outconv_kernel_mxu

    out = pl.pallas_call(
        kernel,
        out_shape=jax.ShapeDtypeStruct((N, Cout, HW), x_nchw.dtype),
        grid_spec=pltpu.PrefetchScalarGridSpec(
            num_scalar_prefetch=0,
            grid=(N, grid_p),
            in_specs=[
                pl.BlockSpec((1, Cin, tm_eff), lambda n, p: (n, 0, p)),
                pl.BlockSpec((Cout, Cin), lambda n, p: (0, 0)),
                pl.BlockSpec((Cout, 1), lambda n, p: (0, 0)),
            ],
            out_specs=pl.BlockSpec((1, Cout, tm_eff), lambda n, p: (n, 0, p)),
        ),
        compiler_params=pltpu.CompilerParams(
            dimension_semantics=("parallel", "parallel"),
        ),
        cost_estimate=cost,
    )(x_mat, w_mat, b_mat)

    # (N, Cout, H*W) -> (N, Cout, H, W): free reshape, already NCHW.
    return out.reshape(N, Cout, H, W)


def init_outconv_params(key, in_channels, out_channels, dtype=jnp.float32):
    """Deterministic init mimicking nn.Conv2d defaults (kaiming-uniform-ish)."""
    kw, kb = jax.random.split(key)
    fan_in = in_channels  # kernel_size=1
    bound = 1.0 / jnp.sqrt(jnp.asarray(fan_in, dtype=jnp.float32))
    weight = jax.random.uniform(
        kw, (out_channels, in_channels, 1, 1), dtype=dtype,
        minval=-bound, maxval=bound)
    bias = jax.random.uniform(
        kb, (out_channels,), dtype=dtype, minval=-bound, maxval=bound)
    return weight, bias


if __name__ == "__main__":
    key = jax.random.PRNGKey(0)
    k_x, k_p = jax.random.split(key)

    N, Cin, H, W = 2, 4, 16, 16
    Cout = 3

    x = jax.random.normal(k_x, (N, Cin, H, W), dtype=jnp.float32)
    weight, bias = init_outconv_params(k_p, Cin, Cout)

    out = outconv_forward(x, weight, bias)
    out = jax.block_until_ready(out)

    # Reference check in plain JAX (same math as nn.Conv2d with k=1).
    ref = (jnp.einsum("nchw,oc->nohw", x, weight.reshape(Cout, Cin))
           + bias[None, :, None, None])
    assert out.shape == (N, Cout, H, W), out.shape
    assert jnp.allclose(out, ref, atol=1e-5, rtol=1e-5), "mismatch vs reference"

    print("KERNEL_OK")
</pallas_src>

<mosaic_0001>
module attributes {stable_mosaic.version = 11 : i64} {
  func.func @_outconv_kernel_vpu(%arg0: i32, %arg1: i32, %arg2: memref<1x4x256xf32, #tpu.memory_space<vmem>>, %arg3: memref<3x4xf32, #tpu.memory_space<vmem>>, %arg4: memref<3x1xf32, #tpu.memory_space<vmem>>, %arg5: memref<1x3x256xf32, #tpu.memory_space<vmem>>) attributes {dimension_semantics = [#tpu.dimension_semantics<parallel>, #tpu.dimension_semantics<parallel>], iteration_bounds = array<i64: 2, 1>, scalar_prefetch = 0 : i64, scratch_operands = 0 : i64, tpu.core_type = #tpu.core_type<tc>, window_params = [{transform_indices = @transform_0, window_bounds = array<i64: 1, 4, 256>}, {pipeline_mode = #tpu.pipeline_mode<synchronous>, transform_indices = @transform_1, window_bounds = array<i64: 3, 4>}, {pipeline_mode = #tpu.pipeline_mode<synchronous>, transform_indices = @transform_2, window_bounds = array<i64: 3, 1>}, {transform_indices = @transform_3, window_bounds = array<i64: 1, 3, 256>}]} {
    %c0 = arith.constant 0 : index
    %c0_0 = arith.constant 0 : index
    %c0_1 = arith.constant 0 : index
    %0 = vector.load %arg2[%c0, %c0_0, %c0_1] : memref<1x4x256xf32, #tpu.memory_space<vmem>>, vector<1x4x256xf32>
    %1 = vector.shape_cast %0 : vector<1x4x256xf32> to vector<4x256xf32>
    %c0_2 = arith.constant 0 : index
    %c0_3 = arith.constant 0 : index
    %2 = vector.load %arg3[%c0_2, %c0_3] : memref<3x4xf32, #tpu.memory_space<vmem>>, vector<3x4xf32>
    %c0_4 = arith.constant 0 : index
    %c0_5 = arith.constant 0 : index
    %3 = vector.load %arg4[%c0_4, %c0_5] : memref<3x1xf32, #tpu.memory_space<vmem>>, vector<3x1xf32>
    %4 = vector.shape_cast %2 : vector<3x4xf32> to vector<3x4x1xf32>
    %5 = vector.shape_cast %1 : vector<4x256xf32> to vector<1x4x256xf32>
    %6 = vector.broadcast %4 : vector<3x4x1xf32> to vector<3x4x256xf32>
    %7 = vector.broadcast %5 : vector<1x4x256xf32> to vector<3x4x256xf32>
    %8 = arith.mulf %6, %7 : vector<3x4x256xf32>
    %cst = arith.constant dense<0.000000e+00> : vector<3x256xf32>
    %9 = vector.multi_reduction <add>, %8, %cst [1] : vector<3x4x256xf32> to vector<3x256xf32>
    %10 = vector.broadcast %3 : vector<3x1xf32> to vector<3x256xf32>
    %11 = arith.addf %9, %10 : vector<3x256xf32>
    %c0_6 = arith.constant 0 : index
    %c0_7 = arith.constant 0 : index
    %c0_8 = arith.constant 0 : index
    %12 = vector.load %arg5[%c0_6, %c0_7, %c0_8] : memref<1x3x256xf32, #tpu.memory_space<vmem>>, vector<1x3x256xf32>
    %13 = vector.shape_cast %12 : vector<1x3x256xf32> to vector<3x256xf32>
    %14 = vector.shape_cast %11 : vector<3x256xf32> to vector<1x3x256xf32>
    tpu.vector_store %arg5[%c0_6, %c0_7, %c0_8], %14 {strides = array<i32>} : memref<1x3x256xf32, #tpu.memory_space<vmem>>, vector<1x3x256xf32>,
    return
  }
  func.func @transform_0(%arg0: i32, %arg1: i32) -> (i32, i32, i32) {
    %c0_i32 = arith.constant 0 : i32
    %c0_i32_0 = arith.constant 0 : i32
    return %arg0, %c0_i32, %arg1 : i32, i32, i32
  }
  func.func @transform_1(%arg0: i32, %arg1: i32) -> (i32, i32) {
    %c0_i32 = arith.constant 0 : i32
    %c0_i32_0 = arith.constant 0 : i32
    %c0_i32_1 = arith.constant 0 : i32
    return %c0_i32, %c0_i32_0 : i32, i32
  }
  func.func @transform_2(%arg0: i32, %arg1: i32) -> (i32, i32) {
    %c0_i32 = arith.constant 0 : i32
    %c0_i32_0 = arith.constant 0 : i32
    %c0_i32_1 = arith.constant 0 : i32
    return %c0_i32, %c0_i32_0 : i32, i32
  }
  func.func @transform_3(%arg0: i32, %arg1: i32) -> (i32, i32, i32) {
    %c0_i32 = arith.constant 0 : i32
    %c0_i32_0 = arith.constant 0 : i32
    return %arg0, %c0_i32, %arg1 : i32, i32, i32
  }
}

</mosaic_0001>

<llo_original>
// kernel: outconv_forward.1
$region0: #{outconv_forward.1}
  #allocation0 [shape = 'u32[]', space=smem, size = 0x4, offset = 0x4, fixed_abs, tag = 'smem constant byte address 0x4 - core index']
  #allocation1 [shape = 'u32[72,128]{1,0:T(1,128)}', space=vmem, size = 0x9000, scoped, tag = 'internal scratch']
  %s0 = inlined_call_operand.vmem [shape: f32[2,4,256], index: 0, kind: input, shape index: {}]
  %s1 = inlined_call_operand.vmem [shape: f32[3,4], index: 1, kind: input, shape index: {}]
  %s2 = inlined_call_operand.vmem [shape: f32[3,1], index: 2, kind: input, shape index: {}]
  %s3 = inlined_call_operand.vmem [shape: f32[2,3,256], index: 3, kind: output, shape index: {}]
  %s4 = sld [smem:[#allocation0]]
  $region45: #{outconv_forward.1} parent=0
    _
  %s6 = ssub.s32 1, %s4
  %s7 = scalar_select 0, %s6, %s4
  loop: start=0, step=1, limit=4
  $region2: #{outconv_forward.1} parent=0 // loop_pre_header
    _
  $region3: #{outconv_forward.1} parent=0 // loop_header
    %s9 = sphi 0, %s13
    %p10 = scmp.ge.s32.totalorder %s9, 4
    %s16 = sphi 0, %s28
    %s17 = sphi 0, %s24
    %s18 = sphi 0, %s16
    %s19 = sphi 0, %s17
    %s20 = sphi 0, %s18
    %s21 = sphi 0, %s19
    %s33 = sphi 0, %s35
    %s36 = sphi 0, %s33
    %s37 = sphi 0, %s36
    %s53 = sphi 0, %s37
    %s57 = sphi 0, %s57
    %s59 = sphi 0, %s57
    %s60 = sphi 0, %s59
    %s74 = sphi 0, %s60
    %s78 = sphi 0, %s78
    %s80 = sphi 0, %s78
    %s81 = sphi 0, %s80
    %s95 = sphi 0, %s81
    %s103 = sphi 0, %s105
    %s106 = sphi 0, %s103
    %s107 = sphi 0, %s106
    %s123 = sphi 0, %s107
  $region4: #{outconv_forward.1} parent=0 // loop_header_branch
    %12 = sbr.rel (%p10) target = $region8
  $region5: #{outconv_forward.1} parent=0 // loop_body
    %s14 = ssub.s32 %s9, 1
    %s15 = ssub.s32 %s9, 2
    %s22 = sadd.s32 1, %s17
    %p23 = scmp.ge.s32.totalorder %s22, 1
    %s24 = scalar_select %p23, 0, %s22
    %s25 = sadd.s32 1, %s16
    %s26 = scalar_select %p23, %s25, %s16
    %p27 = scmp.ge.s32.totalorder %s26, 2
    %s28 = scalar_select %p27, 0, %s26
    %s29 = ssub.s32 %s16, %s28
    %s30 = ssub.s32 %s17, %s24
    %s31 = sor.u32 %s29, %s30
    %p32 = scmp.eq.s32.totalorder %s31, 0
    %s34 = sadd.s32 %s33, 1
    %s35 = scalar_select %p32, %s33, %s34
    %p38 = pneg %p32
    %p39 = scmp.eq.s32.totalorder %s9, 1
    %p40 = por %p38, %p39
    %p41 = scmp.ne.s32.totalorder %s33, %s36
    %p42 = scmp.eq.s32.totalorder %s9, 0
    %p43 = por %p41, %p42
    %p44 = scmp.ne.s32.totalorder %s33, %s36
    %p45 = scmp.eq.s32.totalorder %s14, 1
    %p46 = por %p44, %p45
    %p47 = scmp.ne.s32.totalorder %s36, %s37
    %p48 = scmp.eq.s32.totalorder %s14, 0
    %p49 = por %p47, %p48
    %p50 = scmp.ne.s32.totalorder %s36, %s37
    %p51 = scmp.eq.s32.totalorder %s15, 1
    %p52 = por %p50, %p51
    %p54 = scmp.ne.s32.totalorder %s37, %s53
    %p55 = scmp.eq.s32.totalorder %s15, 0
    %p56 = por %p54, %p55
    %s58 = sadd.s32 %s57, 1
    %p61 = scmp.eq.s32.totalorder %s9, 1
    %p62 = scmp.ne.s32.totalorder %s57, %s59
    %p63 = scmp.eq.s32.totalorder %s9, 0
    %p64 = por %p62, %p63
    %p65 = scmp.ne.s32.totalorder %s57, %s59
    %p66 = scmp.eq.s32.totalorder %s14, 1
    %p67 = por %p65, %p66
    %p68 = scmp.ne.s32.totalorder %s59, %s60
    %p69 = scmp.eq.s32.totalorder %s14, 0
    %p70 = por %p68, %p69
    %p71 = scmp.ne.s32.totalorder %s59, %s60
    %p72 = scmp.eq.s32.totalorder %s15, 1
    %p73 = por %p71, %p72
    %p75 = scmp.ne.s32.totalorder %s60, %s74
    %p76 = scmp.eq.s32.totalorder %s15, 0
    %p77 = por %p75, %p76
    %s79 = sadd.s32 %s78, 1
    %p82 = scmp.eq.s32.totalorder %s9, 1
    %p83 = scmp.ne.s32.totalorder %s78, %s80
    %p84 = scmp.eq.s32.totalorder %s9, 0
    %p85 = por %p83, %p84
    %p86 = scmp.ne.s32.totalorder %s78, %s80
    %p87 = scmp.eq.s32.totalorder %s14, 1
    %p88 = por %p86, %p87
    %p89 = scmp.ne.s32.totalorder %s80, %s81
    %p90 = scmp.eq.s32.totalorder %s14, 0
    %p91 = por %p89, %p90
    %p92 = scmp.ne.s32.totalorder %s80, %s81
    %p93 = scmp.eq.s32.totalorder %s15, 1
    %p94 = por %p92, %p93
    %p96 = scmp.ne.s32.totalorder %s81, %s95
    %p97 = scmp.eq.s32.totalorder %s15, 0
    %p98 = por %p96, %p97
    %s99 = ssub.s32 %s16, %s28
    %s100 = ssub.s32 %s17, %s24
    %s101 = sor.u32 %s99, %s100
    %p102 = scmp.eq.s32.totalorder %s101, 0
    %s104 = sadd.s32 %s103, 1
    %s105 = scalar_select %p102, %s103, %s104
    %p108 = pneg %p102
    %p109 = scmp.eq.s32.totalorder %s9, 1
    %p110 = por %p108, %p109
    %p111 = scmp.ne.s32.totalorder %s103, %s106
    %p112 = scmp.eq.s32.totalorder %s9, 0
    %p113 = por %p111, %p112
    %p114 = scmp.ne.s32.totalorder %s103, %s106
    %p115 = scmp.eq.s32.totalorder %s14, 1
    %p116 = por %p114, %p115
    %p117 = scmp.ne.s32.totalorder %s106, %s107
    %p118 = scmp.eq.s32.totalorder %s14, 0
    %p119 = por %p117, %p118
    %p120 = scmp.ne.s32.totalorder %s106, %s107
    %p121 = scmp.eq.s32.totalorder %s15, 1
    %p122 = por %p120, %p121
    %p124 = scmp.ne.s32.totalorder %s107, %s123
    %p125 = scmp.eq.s32.totalorder %s15, 0
    %p126 = por %p124, %p125
    %p127 = scmp.le.s32.totalorder 1, %s9
    %p128 = scmp.lt.s32.totalorder %s9, 3
    %p129 = pnand %p127, %p128
    %p130 = pneg %p129
    // Predicated region
    $region9: #{outconv_forward.1} parent=5 // pred_check
      _
    $region10: #{outconv_forward.1} parent=5 // pred_check_branch
      %132 = sbr.rel (%p129) target = $region12
    $region11: #{outconv_forward.1} parent=5 // pred_region
      %s133 = ssub.s32 %s9, 1
      // Predicated region
      $region13: #{outconv_forward.1} parent=11 // pred_check
        %p134 = pneg %p70
      $region14: #{outconv_forward.1} parent=11 // pred_check_branch
        %136 = sbr.rel (%p134) target = $region16
      $region15: #{outconv_forward.1} parent=11 // pred_region
        _
      $region16: #{outconv_forward.1} parent=11 // pred_fallthru
        _
      // Predicated region
      $region17: #{outconv_forward.1} parent=11 // pred_check
        %p137 = pneg %p91
      $region18: #{outconv_forward.1} parent=11 // pred_check_branch
        %139 = sbr.rel (%p137) target = $region20
      $region19: #{outconv_forward.1} parent=11 // pred_region
        _
      $region20: #{outconv_forward.1} parent=11 // pred_fallthru
        _
    $region12: #{outconv_forward.1} parent=5 // pred_fallthru
      _
    %p140 = scmp.lt.s32.totalorder %s9, 2
    // Predicated region
    $region21: #{outconv_forward.1} parent=5 // pred_check
      %p141 = pneg %p140
    $region22: #{outconv_forward.1} parent=5 // pred_check_branch
      %143 = sbr.rel (%p141) target = $region24
    $region23: #{outconv_forward.1} parent=5 // pred_region
      // Predicated region
      $region25: #{outconv_forward.1} parent=23 // pred_check
        %p144 = pneg %p43
      $region26: #{outconv_forward.1} parent=23 // pred_check_branch
        %146 = sbr.rel (%p144) target = $region28
      $region27: #{outconv_forward.1} parent=23 // pred_region
        %s147 = smul.u32 2, %s17
        %p148 = scmp.lt.s32.totalorder %s16, 1
        %s149 = scalar_select %p148, %s16, 1
        %p150 = scmp.lt.s32.totalorder %s147, 1
        %s151 = scalar_select %p150, %s147, 1
        %s152 = smul.addr %s149, 2
        %s153 = sadd.s32 %s151, %s152
        %s154 = smul.addr %s153, 4
        %s155 = scalar_lea.vmem %s0, %s154
        %s156 = smul.u32 2, %s17
      $region28: #{outconv_forward.1} parent=23 // pred_fallthru
        _
    $region24: #{outconv_forward.1} parent=5 // pred_fallthru
      _
    %p157 = scmp.le.s32.totalorder 1, %s9
    %p158 = scmp.lt.s32.totalorder %s9, 3
    %p159 = pnand %p157, %p158
    %p160 = pneg %p159
    // Predicated region
    $region29: #{outconv_forward.1} parent=5 // pred_check
      _
    $region30: #{outconv_forward.1} parent=5 // pred_check_branch
      %162 = sbr.rel (%p159) target = $region32
    $region31: #{outconv_forward.1} parent=5 // pred_region
      %s163 = ssub.s32 %s9, 1
      %s164 = smul.u32 2, %s19
      %p165 = scmp.lt.s32.totalorder %s18, 1
      %s166 = scalar_select %p165, %s18, 1
      %p167 = scmp.lt.s32.totalorder %s164, 1
      %s168 = scalar_select %p167, %s164, 1
      %s169 = smul.addr %s166, 2
      %s170 = sadd.s32 %s168, %s169
      %s171 = smul.addr %s170, 4
      %s172 = scalar_lea.vmem %s0, %s171
      %p173 = pneg %p49
      %p174 = pneg %p46
      %p175 = pneg %p70
      %p176 = pneg %p67
      %p177 = pneg %p91
      %p178 = pneg %p88
      %p179 = pneg %p119
      %p180 = pneg %p116
      %s181 = smul.u32 2, %s19
      %p182 = scmp.lt.s32.totalorder %s18, 1
      %s183 = scalar_select %p182, %s18, 1
      %p184 = scmp.lt.s32.totalorder %s181, 1
      %s185 = scalar_select %p184, %s181, 1
      %s186 = smul.addr %s183, 2
      %s187 = sadd.s32 %s185, %s186
      %s188 = smul.addr %s187, 4
      %s189 = scalar_lea.vmem %s3, %s188
      %s190 = smul.u32 2, %s19
      %p191 = scmp.lt.s32.totalorder %s18, 1
      %s192 = scalar_select %p191, %s18, 1
      %p193 = scmp.lt.s32.totalorder %s190, 1
      %s194 = scalar_select %p193, %s190, 1
      %s195 = smul.addr %s192, 2
      %s196 = sadd.s32 %s194, %s195
      %s197 = smul.addr %s196, 4
      %s198 = scalar_lea.vmem %s0, %s197
      %s199 = smul.u32 2, %s19
      %s200 = smul.u32 2, %s19
      %p201 = scmp.lt.s32.totalorder %s18, 1
      %s202 = scalar_select %p201, %s18, 1
      %p203 = scmp.lt.s32.totalorder %s200, 1
      %s204 = scalar_select %p203, %s200, 1
      %s205 = smul.addr %s202, 2
      %s206 = sadd.s32 %s204, %s205
      %s207 = smul.addr %s206, 4
      %s208 = scalar_lea.vmem %s3, %s207
      %s209 = smul.u32 2, %s19
      %v210 = vld [vmem:[%s198] sm:$0xff]
      %v211 = vld [vmem:[%s1] sm:$0x7]
      %v212 = vld [vmem:[%s2] sm:$0x7]
      %v213 = vperm.slane %v211, 0
      %v214 = vlaneseq
      %v215 = vshrl.u32 %v214, 7
      %217 = vset.pattern.permute.xlu0 %v215
      %218 = vperm.xlu0 %217, %v213
      %v219 = vpop.permute.xlu0 %218
      %v220 = vperm.slane %v211, 1
      %v221 = vlaneseq
      %v222 = vshrl.u32 %v221, 7
      %224 = vset.pattern.permute.xlu0 %v222
      %225 = vperm.xlu0 %224, %v220
      %v226 = vpop.permute.xlu0 %225
      %v227 = vperm.slane %v211, 2
      %v228 = vlaneseq
      %v229 = vshrl.u32 %v228, 7
      %231 = vset.pattern.permute.xlu0 %v229
      %232 = vperm.xlu0 %231, %v227
      %v233 = vpop.permute.xlu0 %232
      %235 = vst [vmem:[#allocation1] ss:$2 sm:$0xff] %v210
      %v236 = vld.sshfl [vmem:[#allocation1] sm:$0xff pattern:$0x75316420]
      %v237 = vld.sshfl [vmem:[#allocation1 + $0x8] sm:$0xff pattern:$0x75316420]
      %s238 = scalar_lea.vmem [#allocation1], 16
      %239 = vst [vmem:[%s238] ss:$2 sm:$0xff] %v210
      %v240 = vld.sshfl [vmem:[#allocation1 + $0x10] sm:$0xff pattern:$0x75316420]
      %v241 = vld.sshfl [vmem:[#allocation1 + $0x18] sm:$0xff pattern:$0x75316420]
      %s242 = scalar_lea.vmem [#allocation1], 32
      %243 = vst [vmem:[%s242] ss:$2 sm:$0xff] %v210
      %v244 = vld.sshfl [vmem:[#allocation1 + $0x20] sm:$0xff pattern:$0x75316420]
      %v245 = vld.sshfl [vmem:[#allocation1 + $0x28] sm:$0xff pattern:$0x75316420]
      %v252 = vmul.f32 %v219, %v236
      %v253 = vmul.f32 %v219, %v237
      %v254 = vmul.f32 %v226, %v240
      %v255 = vmul.f32 %v226, %v241
      %v256 = vmul.f32 %v233, %v244
      %v257 = vmul.f32 %v233, %v245
      %vm258 = vcmask 1043456
      %v259 = vsel %vm258, %v252, 0.0
      %v260 = vrot.slane %v259, 4
      %v261 = vadd.f32 %v259, %v260
      %v262 = vrot.slane %v261, 2
      %v263 = vadd.f32 %v261, %v262
      %v264 = vrot.slane %v263, 1
      %v265 = vadd.f32 %v263, %v264
      %v266 = vsel %vm258, %v253, 0.0
      %v267 = vrot.slane %v266, 4
      %v268 = vadd.f32 %v266, %v267
      %v269 = vrot.slane %v268, 2
      %v270 = vadd.f32 %v268, %v269
      %v271 = vrot.slane %v270, 1
      %v272 = vadd.f32 %v270, %v271
      %v273 = vsel %vm258, %v254, 0.0
      %v274 = vrot.slane %v273, 4
      %v275 = vadd.f32 %v273, %v274
      %v276 = vrot.slane %v275, 2
      %v277 = vadd.f32 %v275, %v276
      %v278 = vrot.slane %v277, 1
      %v279 = vadd.f32 %v277, %v278
      %v280 = vsel %vm258, %v255, 0.0
      %v281 = vrot.slane %v280, 4
      %v282 = vadd.f32 %v280, %v281
      %v283 = vrot.slane %v282, 2
      %v284 = vadd.f32 %v282, %v283
      %v285 = vrot.slane %v284, 1
      %v286 = vadd.f32 %v284, %v285
      %v287 = vsel %vm258, %v256, 0.0
      %v288 = vrot.slane %v287, 4
      %v289 = vadd.f32 %v287, %v288
      %v290 = vrot.slane %v289, 2
      %v291 = vadd.f32 %v289, %v290
      %v292 = vrot.slane %v291, 1
      %v293 = vadd.f32 %v291, %v292
      %v294 = vsel %vm258, %v257, 0.0
      %v295 = vrot.slane %v294, 4
      %v296 = vadd.f32 %v294, %v295
      %v297 = vrot.slane %v296, 2
      %v298 = vadd.f32 %v296, %v297
      %v299 = vrot.slane %v298, 1
      %v300 = vadd.f32 %v298, %v299
      %302 = vset.pattern.permute.xlu0 0
      %303 = vperm.xlu0 %302, %v212
      %v304 = vpop.permute.xlu0 %303
      %v305 = vrot.slane %v304, 1
      %v306 = vrot.slane %v304, 2
      %v310 = vadd.f32 %v265, %v304
      %v311 = vadd.f32 %v272, %v304
      %v312 = vadd.f32 %v279, %v305
      %v313 = vadd.f32 %v286, %v305
      %v314 = vadd.f32 %v293, %v306
      %v315 = vadd.f32 %v300, %v306
      %v322 = vrot.slane %v311, 4
      %v323 = vrot.slane %v313, 4
      %v324 = vrot.slane %v315, 4
      %v325 = vsel %vm258, %v310, %v322
      %v326 = vsel %vm258, %v312, %v323
      %v327 = vsel %vm258, %v314, %v324
      %v328 = vrot.slane %v326, 7
      %vm329 = vcmask 1041409
      %v330 = vsel %vm329, %v328, %v325
      %vm331 = vcmask 1045509
      %v332 = vsel %vm331, %v328, %v330
      %v333 = vrot.slane %v327, 6
      %vm334 = vcmask 1042434
      %v335 = vsel %vm334, %v333, %v332
      %vm336 = vcmask 1046534
      %v337 = vsel %vm336, %v333, %v335
      %339 = vst [vmem:[%s208] sm:$0x77] %v337
      %s340 = smul.u32 2, %s19
      %p341 = scmp.lt.s32.totalorder %s18, 1
      %s342 = scalar_select %p341, %s18, 1
      %p343 = scmp.lt.s32.totalorder %s340, 1
      %s344 = scalar_select %p343, %s340, 1
      %s345 = smul.addr %s342, 2
      %s346 = sadd.s32 %s344, %s345
      %s347 = smul.addr %s346, 4
      %s348 = scalar_lea.vmem %s3, %s347
      // Predicated region
      $region33: #{outconv_forward.1} parent=31 // pred_check
        %p349 = pneg %p116
      $region34: #{outconv_forward.1} parent=31 // pred_check_branch
        %351 = sbr.rel (%p349) target = $region36
      $region35: #{outconv_forward.1} parent=31 // pred_region
        %s352 = smul.u32 2, %s19
      $region36: #{outconv_forward.1} parent=31 // pred_fallthru
        _
    $region32: #{outconv_forward.1} parent=5 // pred_fallthru
      _
    %p353 = scmp.le.s32.totalorder 2, %s9
    // Predicated region
    $region37: #{outconv_forward.1} parent=5 // pred_check
      %p354 = pneg %p353
    $region38: #{outconv_forward.1} parent=5 // pred_check_branch
      %356 = sbr.rel (%p354) target = $region40
    $region39: #{outconv_forward.1} parent=5 // pred_region
      %s357 = ssub.s32 %s9, 2
      // Predicated region
      $region41: #{outconv_forward.1} parent=39 // pred_check
        %p358 = pneg %p122
      $region42: #{outconv_forward.1} parent=39 // pred_check_branch
        %360 = sbr.rel (%p358) target = $region44
      $region43: #{outconv_forward.1} parent=39 // pred_region
        %s361 = smul.u32 2, %s21
        %p362 = scmp.lt.s32.totalorder %s20, 1
        %s363 = scalar_select %p362, %s20, 1
        %p364 = scmp.lt.s32.totalorder %s361, 1
        %s365 = scalar_select %p364, %s361, 1
        %s366 = smul.addr %s363, 2
        %s367 = sadd.s32 %s365, %s366
        %s368 = smul.addr %s367, 4
        %s369 = scalar_lea.vmem %s3, %s368
      $region44: #{outconv_forward.1} parent=39 // pred_fallthru
        _
    $region40: #{outconv_forward.1} parent=5 // pred_fallthru
      _
  $region6: #{outconv_forward.1} parent=0 // loop_footer
    %s13 = sadd.s32 1, %s9
  $region7: #{outconv_forward.1} parent=0 // loop_footer_branch
    %8 = sbr.rel target = $region3
  $region8: #{outconv_forward.1} parent=0 // loop_exit
    _

</llo_original>
